<compile_context>
chip_gen: v6e
topology: v6e:2x2x1
jax: 0.10.0
libtpu: 0.0.40
codegen_flags: <defaults>
</compile_context>

<pallas_src>
import functools

import jax
import jax.numpy as jnp
from jax.experimental import pallas as pl
from jax.experimental.pallas import tpu as pltpu


# ----------------------------------------------------------------------------
# Shared lane-wise LayerNorm (feature dim on lanes), eps = 1e-12, affine.
# ----------------------------------------------------------------------------
def _layernorm_lane(h, gamma, beta, eps, out_dtype):
    # h: (rows, F) f32
    mean = jnp.mean(h, axis=-1, keepdims=True)
    cent = h - mean
    var = jnp.mean(cent * cent, axis=-1, keepdims=True)
    inv = jax.lax.rsqrt(var + eps)
    return (cent * inv * gamma + beta).astype(out_dtype)


# ----------------------------------------------------------------------------
# Kernel for already-4-D inputs, flattened to lane-dense (rows, F) tiles.
# ----------------------------------------------------------------------------
def _rows_kernel(x_ref, sc_ref, wt_ref, pgb_ref, o_ref, *, eps):
    # x_ref/sc_ref: (TR, F); wt_ref = W^T (F, F); pgb_ref = [bias;gamma;beta] (3, F)
    pgb = pgb_ref[...]
    bias = pgb[0:1, :].astype(jnp.float32)
    gamma = pgb[1:2, :].astype(jnp.float32)
    beta = pgb[2:3, :].astype(jnp.float32)

    h = jnp.dot(x_ref[...], wt_ref[...], preferred_element_type=jnp.float32)
    h = h + bias + sc_ref[...].astype(jnp.float32)
    # TODO(synk): dropout is identity in eval mode; training-mode RNG dropout
    # (pltpu.prng_random_bits) is not wired in.
    o_ref[...] = _layernorm_lane(h, gamma, beta, eps, o_ref.dtype)


# ----------------------------------------------------------------------------
# Kernel for 3-D module inputs: slabs are (1, F, TU) with feature on sublanes.
# The permute is fused: matmul + residual add happen in (F, TU) layout, then a
# single f32 transpose feeds the lane-wise bias + LayerNorm.
# ----------------------------------------------------------------------------
def _bm_kernel(x_ref, sc_ref, w_ref, pgb_ref, o_ref, *, eps):
    # x_ref/sc_ref: (1, F, TU); w_ref = W (F_out, F_in); o_ref: (1, TU, F)
    pgb = pgb_ref[...]
    bias = pgb[0:1, :].astype(jnp.float32)
    gamma = pgb[1:2, :].astype(jnp.float32)
    beta = pgb[2:3, :].astype(jnp.float32)

    # h[g, u] = sum_f W[g, f] * x_slab[f, u]   == shared_linear over feat_dim
    h = jnp.dot(w_ref[...], x_ref[0], preferred_element_type=jnp.float32)
    h = h + sc_ref[0].astype(jnp.float32)          # residual in (F, TU) layout
    ht = h.T + bias                                 # one XLU transpose -> (TU, F)
    o_ref[0] = _layernorm_lane(ht, gamma, beta, eps, o_ref.dtype)


# ----------------------------------------------------------------------------
# Wrapper matching MMSharedOutput.forward (accepts 3-D or 4-D x / shortcut).
# ----------------------------------------------------------------------------
def mm_shared_output(x, shortcut, params, *, num_modes, feat_dim,
                     tile_rows=512, tile_u=512, eps=1e-12):
    """Returns (B, num_modes, U, feat_dim), like the PyTorch module."""
    F = feat_dim
    w = jnp.asarray(params["w"])
    b = jnp.asarray(params["b"])
    gamma = jnp.asarray(params["gamma"])
    beta = jnp.asarray(params["beta"])
    # Pack bias / gamma / beta into one small resident operand.
    pgb = jnp.stack([b, gamma, beta]).astype(jnp.float32)          # (3, F)

    # Rare mixed-ndim case: normalize shortcut's layout to match x's path.
    if x.ndim != shortcut.ndim:
        if shortcut.ndim == 4:                                     # -> (B, M*F, U)
            Bs, Ms, Us, Fs = shortcut.shape
            shortcut = jnp.transpose(shortcut, (0, 1, 3, 2)).reshape(Bs, Ms * Fs, Us)
        else:                                                      # -> (B, M, U, F)
            Bs, _, Us = shortcut.shape
            shortcut = jnp.transpose(
                shortcut.reshape(Bs, num_modes, F, Us), (0, 1, 3, 2))

    if x.ndim == 4:
        # Already (B, M, U, F): flatten to lane-dense rows (free reshape).
        B, M, U, F_ = x.shape
        assert M == num_modes and F_ == F
        R = B * M * U
        x2 = x.reshape(R, F)
        sc2 = shortcut.reshape(R, F)
        wt = w.T.astype(x.dtype)                    # W^T, native-dtype MXU operand
        TR = R if R <= tile_rows else tile_rows     # full dim, or multiple of 8
        grid = (pl.cdiv(R, TR),)

        out2 = pl.pallas_call(
            functools.partial(_rows_kernel, eps=eps),
            out_shape=jax.ShapeDtypeStruct((R, F), x.dtype),
            grid_spec=pltpu.PrefetchScalarGridSpec(
                num_scalar_prefetch=0,
                grid=grid,
                in_specs=[
                    pl.BlockSpec((TR, F), lambda i: (i, 0)),   # x rows
                    pl.BlockSpec((TR, F), lambda i: (i, 0)),   # shortcut rows
                    pl.BlockSpec((F, F), lambda i: (0, 0)),    # W^T (resident)
                    pl.BlockSpec((3, F), lambda i: (0, 0)),    # bias/gamma/beta
                ],
                out_specs=pl.BlockSpec((TR, F), lambda i: (i, 0)),
            ),
            compiler_params=pltpu.CompilerParams(
                dimension_semantics=("parallel",)),
        )(x2, sc2, wt, pgb)
        return out2.reshape(B, M, U, F)

    # 3-D module layout (B, num_modes * feat_dim, U):
    # view(B, M, F, U) is a pure reshape; the permute is fused in-kernel, so no
    # transposed HBM copies of x / shortcut are ever materialized.
    B, MF, U = x.shape
    assert MF == num_modes * F
    BM = B * num_modes
    x3 = x.reshape(BM, F, U)
    sc3 = shortcut.reshape(BM, F, U)
    w_nat = w.astype(x.dtype)                       # W as-is for (W @ x_slab)
    TU = U if U <= tile_u else tile_u               # full dim, or multiple of 128
    grid = (BM, pl.cdiv(U, TU))

    out3 = pl.pallas_call(
        functools.partial(_bm_kernel, eps=eps),
        out_shape=jax.ShapeDtypeStruct((BM, U, F), x.dtype),
        grid_spec=pltpu.PrefetchScalarGridSpec(
            num_scalar_prefetch=0,
            grid=grid,
            in_specs=[
                pl.BlockSpec((1, F, TU), lambda i, j: (i, 0, j)),   # x slab
                pl.BlockSpec((1, F, TU), lambda i, j: (i, 0, j)),   # shortcut slab
                pl.BlockSpec((F, F), lambda i, j: (0, 0)),          # W (resident)
                pl.BlockSpec((3, F), lambda i, j: (0, 0)),          # bias/gamma/beta
            ],
            out_specs=pl.BlockSpec((1, TU, F), lambda i, j: (i, j, 0)),
        ),
        compiler_params=pltpu.CompilerParams(
            dimension_semantics=("parallel", "parallel")),
    )(x3, sc3, w_nat, pgb)
    return out3.reshape(B, num_modes, U, F)


# ----------------------------------------------------------------------------
# Pure-JAX reference (mirrors the PyTorch forward) for a correctness check.
# ----------------------------------------------------------------------------
def mm_shared_output_ref(x, shortcut, params, *, num_modes, feat_dim, eps=1e-12):
    def to_4d(t):
        if t.ndim == 3:
            B, _, U = t.shape
            t = t.reshape(B, num_modes, feat_dim, U)
            t = jnp.transpose(t, (0, 1, 3, 2))
        return t

    x4 = to_4d(x).astype(jnp.float32)
    sc4 = to_4d(shortcut).astype(jnp.float32)
    w = params["w"].astype(jnp.float32)
    b = params["b"].astype(jnp.float32)
    gamma = params["gamma"].astype(jnp.float32)
    beta = params["beta"].astype(jnp.float32)
    h = jnp.einsum("bmuf,gf->bmug", x4, w) + b + sc4
    mean = jnp.mean(h, axis=-1, keepdims=True)
    var = jnp.mean((h - mean) ** 2, axis=-1, keepdims=True)
    return (h - mean) * jax.lax.rsqrt(var + eps) * gamma + beta


if __name__ == "__main__":
    # Small config consistent with the module (feat_dim lane-aligned to 128).
    B, NUM_MODES, FEAT_DIM, U = 2, 2, 128, 256

    key = jax.random.PRNGKey(0)
    k_x, k_sc, k_w, k_b, k_g, k_be = jax.random.split(key, 6)

    # 3-D inputs as the module would receive them: (B, num_modes*feat_dim, U)
    x3 = jax.random.normal(k_x, (B, NUM_MODES * FEAT_DIM, U), dtype=jnp.float32)
    sc3 = jax.random.normal(k_sc, (B, NUM_MODES * FEAT_DIM, U), dtype=jnp.float32)

    # Deterministic parameter init (nn.Linear-style scale; LayerNorm affine).
    lim = 1.0 / (FEAT_DIM ** 0.5)
    params = {
        "w": jax.random.uniform(k_w, (FEAT_DIM, FEAT_DIM),
                                minval=-lim, maxval=lim, dtype=jnp.float32),
        "b": jax.random.uniform(k_b, (FEAT_DIM,),
                                minval=-lim, maxval=lim, dtype=jnp.float32),
        "gamma": jnp.ones((FEAT_DIM,), jnp.float32)
                 + 0.01 * jax.random.normal(k_g, (FEAT_DIM,), dtype=jnp.float32),
        "beta": 0.01 * jax.random.normal(k_be, (FEAT_DIM,), dtype=jnp.float32),
    }

    ref = mm_shared_output_ref(x3, sc3, params,
                               num_modes=NUM_MODES, feat_dim=FEAT_DIM)

    # Path 1: 3-D module input -> permute fused in-kernel (no HBM transpose).
    out3 = jax.block_until_ready(
        mm_shared_output(x3, sc3, params, num_modes=NUM_MODES, feat_dim=FEAT_DIM))
    assert out3.shape == (B, NUM_MODES, U, FEAT_DIM)
    assert jnp.allclose(out3, ref, atol=2e-4, rtol=2e-4), "3D-path mismatch vs reference"

    # Path 2: already-4-D (B, M, U, F) input -> flat lane-dense row tiles.
    x4 = jnp.transpose(x3.reshape(B, NUM_MODES, FEAT_DIM, U), (0, 1, 3, 2))
    sc4 = jnp.transpose(sc3.reshape(B, NUM_MODES, FEAT_DIM, U), (0, 1, 3, 2))
    out4 = jax.block_until_ready(
        mm_shared_output(x4, sc4, params, num_modes=NUM_MODES, feat_dim=FEAT_DIM))
    assert out4.shape == (B, NUM_MODES, U, FEAT_DIM)
    assert jnp.allclose(out4, ref, atol=2e-4, rtol=2e-4), "4D-path mismatch vs reference"

    # Path 3: mixed ndim (x 3-D, shortcut 4-D) — module allows it.
    out_mix = jax.block_until_ready(
        mm_shared_output(x3, sc4, params, num_modes=NUM_MODES, feat_dim=FEAT_DIM))
    assert jnp.allclose(out_mix, ref, atol=2e-4, rtol=2e-4), "mixed-path mismatch vs reference"

    print("KERNEL_OK")
</pallas_src>

<mosaic_0001>
module attributes {stable_mosaic.version = 11 : i64} {
  func.func @_bm_kernel(%arg0: i32, %arg1: i32, %arg2: memref<1x128x256xf32, #tpu.memory_space<vmem>>, %arg3: memref<1x128x256xf32, #tpu.memory_space<vmem>>, %arg4: memref<128x128xf32, #tpu.memory_space<vmem>>, %arg5: memref<3x128xf32, #tpu.memory_space<vmem>>, %arg6: memref<1x256x128xf32, #tpu.memory_space<vmem>>) attributes {dimension_semantics = [#tpu.dimension_semantics<parallel>, #tpu.dimension_semantics<parallel>], iteration_bounds = array<i64: 4, 1>, scalar_prefetch = 0 : i64, scratch_operands = 0 : i64, tpu.core_type = #tpu.core_type<tc>, window_params = [{transform_indices = @transform_0, window_bounds = array<i64: 1, 128, 256>}, {transform_indices = @transform_1, window_bounds = array<i64: 1, 128, 256>}, {pipeline_mode = #tpu.pipeline_mode<synchronous>, transform_indices = @transform_2, window_bounds = array<i64: 128, 128>}, {pipeline_mode = #tpu.pipeline_mode<synchronous>, transform_indices = @transform_3, window_bounds = array<i64: 3, 128>}, {transform_indices = @transform_4, window_bounds = array<i64: 1, 256, 128>}]} {
    %c0 = arith.constant 0 : index
    %c0_0 = arith.constant 0 : index
    %0 = vector.load %arg5[%c0, %c0_0] : memref<3x128xf32, #tpu.memory_space<vmem>>, vector<3x128xf32>
    %1 = vector.extract_strided_slice %0 {offsets = [0, 0], sizes = [1, 128], strides = [1, 1]} : vector<3x128xf32> to vector<1x128xf32>
    %2 = vector.extract_strided_slice %0 {offsets = [1, 0], sizes = [1, 128], strides = [1, 1]} : vector<3x128xf32> to vector<1x128xf32>
    %3 = vector.extract_strided_slice %0 {offsets = [2, 0], sizes = [1, 128], strides = [1, 1]} : vector<3x128xf32> to vector<1x128xf32>
    %c0_1 = arith.constant 0 : index
    %c0_2 = arith.constant 0 : index
    %4 = vector.load %arg4[%c0_1, %c0_2] : memref<128x128xf32, #tpu.memory_space<vmem>>, vector<128x128xf32>
    %c0_3 = arith.constant 0 : index
    %c0_4 = arith.constant 0 : index
    %c0_5 = arith.constant 0 : index
    %5 = vector.load %arg2[%c0_3, %c0_4, %c0_5] : memref<1x128x256xf32, #tpu.memory_space<vmem>>, vector<1x128x256xf32>
    %6 = vector.shape_cast %5 : vector<1x128x256xf32> to vector<128x256xf32>
    %cst = arith.constant dense<0.000000e+00> : vector<128x256xf32>
    %7 = tpu.matmul %4, %6, %cst {dimension_numbers = #tpu.dot_dimension_numbers<[1], [0], [0], [1], [0, 0, 1, 1], [], []>} : vector<128x128xf32>, vector<128x256xf32>, vector<128x256xf32> -> vector<128x256xf32>
    %c0_6 = arith.constant 0 : index
    %c0_7 = arith.constant 0 : index
    %c0_8 = arith.constant 0 : index
    %8 = vector.load %arg3[%c0_6, %c0_7, %c0_8] : memref<1x128x256xf32, #tpu.memory_space<vmem>>, vector<1x128x256xf32>
    %9 = vector.shape_cast %8 : vector<1x128x256xf32> to vector<128x256xf32>
    %10 = arith.addf %7, %9 : vector<128x256xf32>
    %11 = tpu.transpose %10, [1, 0] : vector<128x256xf32> -> vector<256x128xf32>
    %12 = vector.broadcast %1 : vector<1x128xf32> to vector<256x128xf32>
    %13 = arith.addf %11, %12 : vector<256x128xf32>
    %cst_9 = arith.constant dense<0.000000e+00> : vector<256xf32>
    %14 = vector.multi_reduction <add>, %13, %cst_9 [1] : vector<256x128xf32> to vector<256xf32>
    %15 = vector.shape_cast %14 : vector<256xf32> to vector<256x1xf32>
    %cst_10 = arith.constant 1.280000e+02 : f32
    %16 = vector.broadcast %cst_10 : f32 to vector<256x1xf32>
    %17 = arith.divf %15, %16 : vector<256x1xf32>
    %18 = vector.broadcast %17 : vector<256x1xf32> to vector<256x128xf32>
    %19 = arith.subf %13, %18 : vector<256x128xf32>
    %20 = arith.mulf %19, %19 : vector<256x128xf32>
    %cst_11 = arith.constant dense<0.000000e+00> : vector<256xf32>
    %21 = vector.multi_reduction <add>, %20, %cst_11 [1] : vector<256x128xf32> to vector<256xf32>
    %22 = vector.shape_cast %21 : vector<256xf32> to vector<256x1xf32>
    %cst_12 = arith.constant 1.280000e+02 : f32
    %23 = vector.broadcast %cst_12 : f32 to vector<256x1xf32>
    %24 = arith.divf %22, %23 : vector<256x1xf32>
    %cst_13 = arith.constant 9.99999996E-13 : f32
    %25 = vector.broadcast %cst_13 : f32 to vector<256x1xf32>
    %26 = arith.addf %24, %25 : vector<256x1xf32>
    %27 = math.rsqrt %26 : vector<256x1xf32>
    %28 = vector.broadcast %27 : vector<256x1xf32> to vector<256x128xf32>
    %29 = arith.mulf %19, %28 : vector<256x128xf32>
    %30 = vector.broadcast %2 : vector<1x128xf32> to vector<256x128xf32>
    %31 = arith.mulf %29, %30 : vector<256x128xf32>
    %32 = vector.broadcast %3 : vector<1x128xf32> to vector<256x128xf32>
    %33 = arith.addf %31, %32 : vector<256x128xf32>
    %c0_14 = arith.constant 0 : index
    %c0_15 = arith.constant 0 : index
    %c0_16 = arith.constant 0 : index
    %34 = vector.load %arg6[%c0_14, %c0_15, %c0_16] : memref<1x256x128xf32, #tpu.memory_space<vmem>>, vector<1x256x128xf32>
    %35 = vector.shape_cast %34 : vector<1x256x128xf32> to vector<256x128xf32>
    %36 = vector.shape_cast %33 : vector<256x128xf32> to vector<1x256x128xf32>
    tpu.vector_store %arg6[%c0_14, %c0_15, %c0_16], %36 {strides = array<i32>} : memref<1x256x128xf32, #tpu.memory_space<vmem>>, vector<1x256x128xf32>,
    return
  }
  func.func @transform_0(%arg0: i32, %arg1: i32) -> (i32, i32, i32) {
    %c0_i32 = arith.constant 0 : i32
    %c0_i32_0 = arith.constant 0 : i32
    return %arg0, %c0_i32, %arg1 : i32, i32, i32
  }
  func.func @transform_1(%arg0: i32, %arg1: i32) -> (i32, i32, i32) {
    %c0_i32 = arith.constant 0 : i32
    %c0_i32_0 = arith.constant 0 : i32
    return %arg0, %c0_i32, %arg1 : i32, i32, i32
  }
  func.func @transform_2(%arg0: i32, %arg1: i32) -> (i32, i32) {
    %c0_i32 = arith.constant 0 : i32
    %c0_i32_0 = arith.constant 0 : i32
    %c0_i32_1 = arith.constant 0 : i32
    return %c0_i32, %c0_i32_0 : i32, i32
  }
  func.func @transform_3(%arg0: i32, %arg1: i32) -> (i32, i32) {
    %c0_i32 = arith.constant 0 : i32
    %c0_i32_0 = arith.constant 0 : i32
    %c0_i32_1 = arith.constant 0 : i32
    return %c0_i32, %c0_i32_0 : i32, i32
  }
  func.func @transform_4(%arg0: i32, %arg1: i32) -> (i32, i32, i32) {
    %c0_i32 = arith.constant 0 : i32
    %c0_i32_0 = arith.constant 0 : i32
    return %arg0, %arg1, %c0_i32 : i32, i32, i32
  }
}

</mosaic_0001>

<llo_original>
// kernel: tpu_custom_call.1
$region0: #{tpu_custom_call.1}
  #allocation0 [shape = 'u32[]', space=smem, size = 0x4, offset = 0x4, fixed_abs, tag = 'smem constant byte address 0x4 - core index']
  #allocation1 [shape = 'u32[144,128]{1,0:T(1,128)}', space=vmem, size = 0x12000, scoped, tag = 'internal scratch']
  %s0 = inlined_call_operand.hbm [shape: f32[4,128,256], index: 0, kind: input, shape index: {}]
  %s1 = inlined_call_operand.hbm [shape: f32[4,128,256], index: 1, kind: input, shape index: {}]
  %s2 = inlined_call_operand.hbm [shape: f32[128,128], index: 2, kind: input, shape index: {}]
  %s3 = inlined_call_operand.vmem [shape: f32[3,128], index: 3, kind: input, shape index: {}]
  %s4 = inlined_call_operand.hbm [shape: f32[4,256,128], index: 4, kind: output, shape index: {}]
  %s5 = sld [smem:[#allocation0]]
  $region61: #{tpu_custom_call.1} parent=0
    _
  %s7 = ssub.s32 1, %s5
  %s8 = scalar_select 0, %s7, %s5
  $region1: #{tpu_custom_call.1} parent=0
    #allocation2 [shape = 'u8[262144]{0}', space=vmem, size = 0x40000, scoped, tag = 'input window, operand 0']
    #allocation3 [shape = 's32[2]{0}', space=sflag, size = 0x8, scoped, tag = 'scoped memory for tpu_custom_call.1']
    #allocation4 [shape = 's32[2]{0}', space=sflag, size = 0x8, scoped, tag = 'scoped memory for tpu_custom_call.1']
    #allocation5 [shape = 'u8[262144]{0}', space=vmem, size = 0x40000, scoped, tag = 'input window, operand 1']
    #allocation6 [shape = 's32[2]{0}', space=sflag, size = 0x8, scoped, tag = 'scoped memory for tpu_custom_call.1']
    #allocation7 [shape = 'u8[65536]{0}', space=vmem, size = 0x10000, scoped, tag = 'input window, operand 2, single buffered']
    #allocation8 [shape = 'u8[262144]{0}', space=vmem, size = 0x40000, scoped, tag = 'output window, operand 0']
    %9 = vsyncpa [#allocation3], 0
    %s10 = scalar_lea.sflag [#allocation3], 1
    %11 = vsyncpa %s10, 0
    %12 = vsyncpa [#allocation6], 0
    %s13 = scalar_lea.sflag [#allocation6], 1
    %14 = vsyncpa %s13, 0
    %15 = vsyncpa [#allocation4], 0
    %s16 = scalar_lea.sflag [#allocation4], 1
    %17 = vsyncpa %s16, 0
    loop: start=0, step=1, limit=6
    $region2: #{tpu_custom_call.1} parent=1 // loop_pre_header
      _
    $region3: #{tpu_custom_call.1} parent=1 // loop_header
      %s19 = sphi 0, %s23
      %p20 = scmp.ge.s32.totalorder %s19, 6
      %s26 = sphi 0, %s38
      %s27 = sphi 0, %s34
      %s28 = sphi 0, %s26
      %s29 = sphi 0, %s27
      %s30 = sphi 0, %s28
      %s31 = sphi 0, %s29
      %s43 = sphi 0, %s45
      %s46 = sphi 0, %s43
      %s47 = sphi 0, %s46
      %s63 = sphi 0, %s47
      %s71 = sphi 0, %s73
      %s74 = sphi 0, %s71
      %s75 = sphi 0, %s74
      %s91 = sphi 0, %s75
      %s95 = sphi 0, %s95
      %s97 = sphi 0, %s95
      %s98 = sphi 0, %s97
      %s112 = sphi 0, %s98
      %s116 = sphi 0, %s116
      %s118 = sphi 0, %s116
      %s119 = sphi 0, %s118
      %s133 = sphi 0, %s119
      %s141 = sphi 0, %s143
      %s144 = sphi 0, %s141
      %s145 = sphi 0, %s144
      %s161 = sphi 0, %s145
    $region4: #{tpu_custom_call.1} parent=1 // loop_header_branch
      %22 = sbr.rel (%p20) target = $region8
    $region5: #{tpu_custom_call.1} parent=1 // loop_body
      %s24 = ssub.s32 %s19, 1
      %s25 = ssub.s32 %s19, 2
      %s32 = sadd.s32 1, %s27
      %p33 = scmp.ge.s32.totalorder %s32, 1
      %s34 = scalar_select %p33, 0, %s32
      %s35 = sadd.s32 1, %s26
      %s36 = scalar_select %p33, %s35, %s26
      %p37 = scmp.ge.s32.totalorder %s36, 4
      %s38 = scalar_select %p37, 0, %s36
      %s39 = ssub.s32 %s26, %s38
      %s40 = ssub.s32 %s27, %s34
      %s41 = sor.u32 %s39, %s40
      %p42 = scmp.eq.s32.totalorder %s41, 0
      %s44 = sadd.s32 %s43, 1
      %s45 = scalar_select %p42, %s43, %s44
      %p48 = pneg %p42
      %p49 = scmp.eq.s32.totalorder %s19, 3
      %p50 = por %p48, %p49
      %p51 = scmp.ne.s32.totalorder %s43, %s46
      %p52 = scmp.eq.s32.totalorder %s19, 0
      %p53 = por %p51, %p52
      %p54 = scmp.ne.s32.totalorder %s43, %s46
      %p55 = scmp.eq.s32.totalorder %s24, 3
      %p56 = por %p54, %p55
      %p57 = scmp.ne.s32.totalorder %s46, %s47
      %p58 = scmp.eq.s32.totalorder %s24, 0
      %p59 = por %p57, %p58
      %p60 = scmp.ne.s32.totalorder %s46, %s47
      %p61 = scmp.eq.s32.totalorder %s25, 3
      %p62 = por %p60, %p61
      %p64 = scmp.ne.s32.totalorder %s47, %s63
      %p65 = scmp.eq.s32.totalorder %s25, 0
      %p66 = por %p64, %p65
      %s67 = ssub.s32 %s26, %s38
      %s68 = ssub.s32 %s27, %s34
      %s69 = sor.u32 %s67, %s68
      %p70 = scmp.eq.s32.totalorder %s69, 0
      %s72 = sadd.s32 %s71, 1
      %s73 = scalar_select %p70, %s71, %s72
      %p76 = pneg %p70
      %p77 = scmp.eq.s32.totalorder %s19, 3
      %p78 = por %p76, %p77
      %p79 = scmp.ne.s32.totalorder %s71, %s74
      %p80 = scmp.eq.s32.totalorder %s19, 0
      %p81 = por %p79, %p80
      %p82 = scmp.ne.s32.totalorder %s71, %s74
      %p83 = scmp.eq.s32.totalorder %s24, 3
      %p84 = por %p82, %p83
      %p85 = scmp.ne.s32.totalorder %s74, %s75
      %p86 = scmp.eq.s32.totalorder %s24, 0
      %p87 = por %p85, %p86
      %p88 = scmp.ne.s32.totalorder %s74, %s75
      %p89 = scmp.eq.s32.totalorder %s25, 3
      %p90 = por %p88, %p89
      %p92 = scmp.ne.s32.totalorder %s75, %s91
      %p93 = scmp.eq.s32.totalorder %s25, 0
      %p94 = por %p92, %p93
      %s96 = sadd.s32 %s95, 1
      %p99 = scmp.eq.s32.totalorder %s19, 3
      %p100 = scmp.ne.s32.totalorder %s95, %s97
      %p101 = scmp.eq.s32.totalorder %s19, 0
      %p102 = por %p100, %p101
      %p103 = scmp.ne.s32.totalorder %s95, %s97
      %p104 = scmp.eq.s32.totalorder %s24, 3
      %p105 = por %p103, %p104
      %p106 = scmp.ne.s32.totalorder %s97, %s98
      %p107 = scmp.eq.s32.totalorder %s24, 0
      %p108 = por %p106, %p107
      %p109 = scmp.ne.s32.totalorder %s97, %s98
      %p110 = scmp.eq.s32.totalorder %s25, 3
      %p111 = por %p109, %p110
      %p113 = scmp.ne.s32.totalorder %s98, %s112
      %p114 = scmp.eq.s32.totalorder %s25, 0
      %p115 = por %p113, %p114
      %s117 = sadd.s32 %s116, 1
      %p120 = scmp.eq.s32.totalorder %s19, 3
      %p121 = scmp.ne.s32.totalorder %s116, %s118
      %p122 = scmp.eq.s32.totalorder %s19, 0
      %p123 = por %p121, %p122
      %p124 = scmp.ne.s32.totalorder %s116, %s118
      %p125 = scmp.eq.s32.totalorder %s24, 3
      %p126 = por %p124, %p125
      %p127 = scmp.ne.s32.totalorder %s118, %s119
      %p128 = scmp.eq.s32.totalorder %s24, 0
      %p129 = por %p127, %p128
      %p130 = scmp.ne.s32.totalorder %s118, %s119
      %p131 = scmp.eq.s32.totalorder %s25, 3
      %p132 = por %p130, %p131
      %p134 = scmp.ne.s32.totalorder %s119, %s133
      %p135 = scmp.eq.s32.totalorder %s25, 0
      %p136 = por %p134, %p135
      %s137 = ssub.s32 %s26, %s38
      %s138 = ssub.s32 %s27, %s34
      %s139 = sor.u32 %s137, %s138
      %p140 = scmp.eq.s32.totalorder %s139, 0
      %s142 = sadd.s32 %s141, 1
      %s143 = scalar_select %p140, %s141, %s142
      %p146 = pneg %p140
      %p147 = scmp.eq.s32.totalorder %s19, 3
      %p148 = por %p146, %p147
      %p149 = scmp.ne.s32.totalorder %s141, %s144
      %p150 = scmp.eq.s32.totalorder %s19, 0
      %p151 = por %p149, %p150
      %p152 = scmp.ne.s32.totalorder %s141, %s144
      %p153 = scmp.eq.s32.totalorder %s24, 3
      %p154 = por %p152, %p153
      %p155 = scmp.ne.s32.totalorder %s144, %s145
      %p156 = scmp.eq.s32.totalorder %s24, 0
      %p157 = por %p155, %p156
      %p158 = scmp.ne.s32.totalorder %s144, %s145
      %p159 = scmp.eq.s32.totalorder %s25, 3
      %p160 = por %p158, %p159
      %p162 = scmp.ne.s32.totalorder %s145, %s161
      %p163 = scmp.eq.s32.totalorder %s25, 0
      %p164 = por %p162, %p163
      %p165 = scmp.le.s32.totalorder 1, %s19
      %p166 = scmp.lt.s32.totalorder %s19, 5
      %p167 = pnand %p165, %p166
      %p168 = pneg %p167
      // Predicated region
      $region9: #{tpu_custom_call.1} parent=5 // pred_check
        _
      $region10: #{tpu_custom_call.1} parent=5 // pred_check_branch
        %170 = sbr.rel (%p167) target = $region12
      $region11: #{tpu_custom_call.1} parent=5 // pred_region
        %s171 = ssub.s32 %s19, 1
        // Predicated region
        $region13: #{tpu_custom_call.1} parent=11 // pred_check
          %p172 = pneg %p108
        $region14: #{tpu_custom_call.1} parent=11 // pred_check_branch
          %174 = sbr.rel (%p172) target = $region16
        $region15: #{tpu_custom_call.1} parent=11 // pred_region
          %s176 = ssub.s32 2048, 2048
          %177 = vsyncadd [#allocation6], %s176
          %s178 = sshll.u32 [#allocation7], 4
          %s179 = int_to_ptr.vmem [resolvable:$true] %s178
          %184 = dma.hbm_to_vmem [thread:$0]  %s2, 2048, %s179, [#allocation6], 128, 128, 8
        $region16: #{tpu_custom_call.1} parent=11 // pred_fallthru
          _
        // Predicated region
        $region17: #{tpu_custom_call.1} parent=11 // pred_check
          %p185 = pneg %p129
        $region18: #{tpu_custom_call.1} parent=11 // pred_check_branch
          %187 = sbr.rel (%p185) target = $region20
        $region19: #{tpu_custom_call.1} parent=11 // pred_region
          _
        $region20: #{tpu_custom_call.1} parent=11 // pred_fallthru
          _
      $region12: #{tpu_custom_call.1} parent=5 // pred_fallthru
        _
      %p188 = scmp.lt.s32.totalorder %s19, 4
      // Predicated region
      $region21: #{tpu_custom_call.1} parent=5 // pred_check
        %p189 = pneg %p188
      $region22: #{tpu_custom_call.1} parent=5 // pred_check_branch
        %191 = sbr.rel (%p189) target = $region24
      $region23: #{tpu_custom_call.1} parent=5 // pred_region
        // Predicated region
        $region25: #{tpu_custom_call.1} parent=23 // pred_check
          %p192 = pneg %p53
        $region26: #{tpu_custom_call.1} parent=23 // pred_check_branch
          %194 = sbr.rel (%p192) target = $region28
        $region27: #{tpu_custom_call.1} parent=23 // pred_region
          %s195 = sand.u32 %s43, 1
          %s196 = scalar_lea.sflag [#allocation3], %s195
          %s197 = sand.u32 %s43, 1
          %s198 = smul.addr %s197, 256
          %s199 = scalar_lea.vmem [#allocation2], %s198
          %s200 = smul.u32 2, %s27
          %s202 = ssub.s32 4096, 4096
          %203 = vsyncadd %s196, %s202
          %s204 = smul.addr %s26, 32
          %s205 = sadd.s32 %s200, %s204
          %s206 = smul.addr %s205, 128
          %s207 = scalar_lea.hbm %s0, %s206
          %s208 = sshll.u32 %s199, 4
          %s209 = int_to_ptr.vmem [resolvable:$true] %s208
          %214 = dma.hbm_to_vmem [thread:$0]  %s207, 4096, %s209, %s196, 256, 256, 16
        $region28: #{tpu_custom_call.1} parent=23 // pred_fallthru
          _
        // Predicated region
        $region29: #{tpu_custom_call.1} parent=23 // pred_check
          %p215 = pneg %p81
        $region30: #{tpu_custom_call.1} parent=23 // pred_check_branch
          %217 = sbr.rel (%p215) target = $region32
        $region31: #{tpu_custom_call.1} parent=23 // pred_region
          %s218 = sand.u32 %s19, 1
          %s219 = scalar_lea.sflag [#allocation6], %s218
          %s220 = sand.u32 %s71, 1
          %s221 = smul.addr %s220, 256
          %s222 = scalar_lea.vmem [#allocation5], %s221
          %s223 = smul.u32 2, %s27
          %s225 = ssub.s32 4096, 4096
          %226 = vsyncadd %s219, %s225
          %s227 = smul.addr %s26, 32
          %s228 = sadd.s32 %s223, %s227
          %s229 = smul.addr %s228, 128
          %s230 = scalar_lea.hbm %s1, %s229
          %s231 = sshll.u32 %s222, 4
          %s232 = int_to_ptr.vmem [resolvable:$true] %s231
          %237 = dma.hbm_to_vmem [thread:$0]  %s230, 4096, %s232, %s219, 256, 256, 16
        $region32: #{tpu_custom_call.1} parent=23 // pred_fallthru
          _
      $region24: #{tpu_custom_call.1} parent=5 // pred_fallthru
        _
      %p238 = scmp.le.s32.totalorder 1, %s19
      %p239 = scmp.lt.s32.totalorder %s19, 5
      %p240 = pnand %p238, %p239
      %p241 = pneg %p240
      // Predicated region
      $region33: #{tpu_custom_call.1} parent=5 // pred_check
        _
      $region34: #{tpu_custom_call.1} parent=5 // pred_check_branch
        %243 = sbr.rel (%p240) target = $region36
      $region35: #{tpu_custom_call.1} parent=5 // pred_region
        %s244 = ssub.s32 %s19, 1
        %s245 = sand.u32 %s46, 1
        %s246 = scalar_lea.sflag [#allocation3], %s245
        %s247 = sand.u32 %s46, 1
        %s248 = smul.addr %s247, 256
        %s249 = scalar_lea.vmem [#allocation2], %s248
        // Predicated region
        $region37: #{tpu_custom_call.1} parent=35 // pred_check
          %p250 = pneg %p59
        $region38: #{tpu_custom_call.1} parent=35 // pred_check_branch
          %252 = sbr.rel (%p250) target = $region40
        $region39: #{tpu_custom_call.1} parent=35 // pred_region
          %253 = dma.done %s246, 4096
        $region40: #{tpu_custom_call.1} parent=35 // pred_fallthru
          _
        %s254 = sand.u32 %s24, 1
        %s255 = scalar_lea.sflag [#allocation6], %s254
        %s256 = sand.u32 %s74, 1
        %s257 = smul.addr %s256, 256
        %s258 = scalar_lea.vmem [#allocation5], %s257
        // Predicated region
        $region41: #{tpu_custom_call.1} parent=35 // pred_check
          %p259 = pneg %p87
        $region42: #{tpu_custom_call.1} parent=35 // pred_check_branch
          %261 = sbr.rel (%p259) target = $region44
        $region43: #{tpu_custom_call.1} parent=35 // pred_region
          %262 = dma.done %s255, 4096
        $region44: #{tpu_custom_call.1} parent=35 // pred_fallthru
          _
        // Predicated region
        $region45: #{tpu_custom_call.1} parent=35 // pred_check
          %p263 = pneg %p108
        $region46: #{tpu_custom_call.1} parent=35 // pred_check_branch
          %265 = sbr.rel (%p263) target = $region48
        $region47: #{tpu_custom_call.1} parent=35 // pred_region
          %266 = dma.done [#allocation6], 2048
        $region48: #{tpu_custom_call.1} parent=35 // pred_fallthru
          _
        %s267 = sand.u32 %s46, 1
        %s268 = scalar_lea.sflag [#allocation3], %s267
        %s269 = sand.u32 %s46, 1
        %s270 = smul.addr %s269, 256
        %s271 = scalar_lea.vmem [#allocation2], %s270
        %p272 = pneg %p59
        %p273 = pneg %p56
        %s274 = sand.u32 %s24, 1
        %s275 = scalar_lea.sflag [#allocation6], %s274
        %s276 = sand.u32 %s74, 1
        %s277 = smul.addr %s276, 256
        %s278 = scalar_lea.vmem [#allocation5], %s277
        %p279 = pneg %p87
        %p280 = pneg %p84
        %p281 = pneg %p108
        %p282 = pneg %p105
        %p283 = pneg %p129
        %p284 = pneg %p126
        %p285 = pneg %p157
        %p286 = pneg %p154
        %s287 = sand.u32 %s144, 1
        %s288 = scalar_lea.sflag [#allocation4], %s287
        %s289 = sand.u32 %s144, 1
        %s290 = smul.addr %s289, 256
        %s291 = scalar_lea.vmem [#allocation8], %s290
        %s292 = smul.u32 2, %s29
        %s293 = smul.u32 2, %s29
        %s294 = smul.u32 32, %s29
        %v295 = vld [vmem:[%s3] sm:$0x7]
        %v296 = vld [vmem:[#allocation7] sm:$0xff]
        %v297 = vld [vmem:[#allocation7 + $0x8] sm:$0xff]
        %v298 = vld [vmem:[#allocation7 + $0x10] sm:$0xff]
        %v299 = vld [vmem:[#allocation7 + $0x18] sm:$0xff]
        %v300 = vld [vmem:[#allocation7 + $0x20] sm:$0xff]
        %v301 = vld [vmem:[#allocation7 + $0x28] sm:$0xff]
        %v302 = vld [vmem:[#allocation7 + $0x30] sm:$0xff]
        %v303 = vld [vmem:[#allocation7 + $0x38] sm:$0xff]
        %v304 = vld [vmem:[#allocation7 + $0x40] sm:$0xff]
        %v305 = vld [vmem:[#allocation7 + $0x48] sm:$0xff]
        %v306 = vld [vmem:[#allocation7 + $0x50] sm:$0xff]
        %v307 = vld [vmem:[#allocation7 + $0x58] sm:$0xff]
        %v308 = vld [vmem:[#allocation7 + $0x60] sm:$0xff]
        %v309 = vld [vmem:[#allocation7 + $0x68] sm:$0xff]
        %v310 = vld [vmem:[#allocation7 + $0x70] sm:$0xff]
        %v311 = vld [vmem:[#allocation7 + $0x78] sm:$0xff]
        %v312 = vld [vmem:[%s249] sm:$0xff]
        %v313 = vld [vmem:[%s249 + $0x8] sm:$0xff]
        %v314 = vld [vmem:[%s249 + $0x10] sm:$0xff]
        %v315 = vld [vmem:[%s249 + $0x18] sm:$0xff]
        %v316 = vld [vmem:[%s249 + $0x20] sm:$0xff]
        %v317 = vld [vmem:[%s249 + $0x28] sm:$0xff]
        %v318 = vld [vmem:[%s249 + $0x30] sm:$0xff]
        %v319 = vld [vmem:[%s249 + $0x38] sm:$0xff]
        %v320 = vld [vmem:[%s249 + $0x40] sm:$0xff]
        %v321 = vld [vmem:[%s249 + $0x48] sm:$0xff]
        %v322 = vld [vmem:[%s249 + $0x50] sm:$0xff]
        %v323 = vld [vmem:[%s249 + $0x58] sm:$0xff]
        %v324 = vld [vmem:[%s249 + $0x60] sm:$0xff]
        %v325 = vld [vmem:[%s249 + $0x68] sm:$0xff]
        %v326 = vld [vmem:[%s249 + $0x70] sm:$0xff]
        %v327 = vld [vmem:[%s249 + $0x78] sm:$0xff]
        %v328 = vld [vmem:[%s249 + $0x80] sm:$0xff]
        %v329 = vld [vmem:[%s249 + $0x88] sm:$0xff]
        %v330 = vld [vmem:[%s249 + $0x90] sm:$0xff]
        %v331 = vld [vmem:[%s249 + $0x98] sm:$0xff]
        %v332 = vld [vmem:[%s249 + $0xa0] sm:$0xff]
        %v333 = vld [vmem:[%s249 + $0xa8] sm:$0xff]
        %v334 = vld [vmem:[%s249 + $0xb0] sm:$0xff]
        %v335 = vld [vmem:[%s249 + $0xb8] sm:$0xff]
        %v336 = vld [vmem:[%s249 + $0xc0] sm:$0xff]
        %v337 = vld [vmem:[%s249 + $0xc8] sm:$0xff]
        %v338 = vld [vmem:[%s249 + $0xd0] sm:$0xff]
        %v339 = vld [vmem:[%s249 + $0xd8] sm:$0xff]
        %v340 = vld [vmem:[%s249 + $0xe0] sm:$0xff]
        %v341 = vld [vmem:[%s249 + $0xe8] sm:$0xff]
        %v342 = vld [vmem:[%s249 + $0xf0] sm:$0xff]
        %v343 = vld [vmem:[%s249 + $0xf8] sm:$0xff]
        %v344 = vld [vmem:[%s258] sm:$0xff]
        %v345 = vld [vmem:[%s258 + $0x8] sm:$0xff]
        %v346 = vld [vmem:[%s258 + $0x10] sm:$0xff]
        %v347 = vld [vmem:[%s258 + $0x18] sm:$0xff]
        %v348 = vld [vmem:[%s258 + $0x20] sm:$0xff]
        %v349 = vld [vmem:[%s258 + $0x28] sm:$0xff]
        %v350 = vld [vmem:[%s258 + $0x30] sm:$0xff]
        %v351 = vld [vmem:[%s258 + $0x38] sm:$0xff]
        %v352 = vld [vmem:[%s258 + $0x40] sm:$0xff]
        %v353 = vld [vmem:[%s258 + $0x48] sm:$0xff]
        %v354 = vld [vmem:[%s258 + $0x50] sm:$0xff]
        %v355 = vld [vmem:[%s258 + $0x58] sm:$0xff]
        %v356 = vld [vmem:[%s258 + $0x60] sm:$0xff]
        %v357 = vld [vmem:[%s258 + $0x68] sm:$0xff]
        %v358 = vld [vmem:[%s258 + $0x70] sm:$0xff]
        %v359 = vld [vmem:[%s258 + $0x78] sm:$0xff]
        %v360 = vld [vmem:[%s258 + $0x80] sm:$0xff]
        %v361 = vld [vmem:[%s258 + $0x88] sm:$0xff]
        %v362 = vld [vmem:[%s258 + $0x90] sm:$0xff]
        %v363 = vld [vmem:[%s258 + $0x98] sm:$0xff]
        %v364 = vld [vmem:[%s258 + $0xa0] sm:$0xff]
        %v365 = vld [vmem:[%s258 + $0xa8] sm:$0xff]
        %v366 = vld [vmem:[%s258 + $0xb0] sm:$0xff]
        %v367 = vld [vmem:[%s258 + $0xb8] sm:$0xff]
        %v368 = vld [vmem:[%s258 + $0xc0] sm:$0xff]
        %v369 = vld [vmem:[%s258 + $0xc8] sm:$0xff]
        %v370 = vld [vmem:[%s258 + $0xd0] sm:$0xff]
        %v371 = vld [vmem:[%s258 + $0xd8] sm:$0xff]
        %v372 = vld [vmem:[%s258 + $0xe0] sm:$0xff]
        %v373 = vld [vmem:[%s258 + $0xe8] sm:$0xff]
        %v374 = vld [vmem:[%s258 + $0xf0] sm:$0xff]
        %v375 = vld [vmem:[%s258 + $0xf8] sm:$0xff]
        %376 = vmatprep.subr.mxu0 %v343
        %377 = vmatpush1.msra.mxu0 %v342
        %378 = vmatprep.subr.mxu0 %v341
        %379 = vmatpush1.msra.mxu0 %v340
        %380 = vmatprep.subr.mxu0 %v339
        %381 = vmatpush1.msra.mxu0 %v338
        %382 = vmatprep.subr.mxu0 %v337
        %383 = vmatpush1.msra.mxu0 %v336
        %384 = vmatprep.subr.mxu0 %v335
        %385 = vmatpush1.msra.mxu0 %v334
        %386 = vmatprep.subr.mxu0 %v333
        %387 = vmatpush1.msra.mxu0 %v332
        %388 = vmatprep.subr.mxu0 %v331
        %389 = vmatpush1.msra.mxu0 %v330
        %390 = vmatprep.subr.mxu0 %v329
        %391 = vmatpush1.msra.mxu0 %v328
        %392 = vmatprep.subr.mxu0 %v327
        %393 = vmatpush1.msra.mxu0 %v326
        %394 = vmatprep.subr.mxu0 %v325
        %395 = vmatpush1.msra.mxu0 %v324
        %396 = vmatprep.subr.mxu0 %v323
        %397 = vmatpush1.msra.mxu0 %v322
        %398 = vmatprep.subr.mxu0 %v321
        %399 = vmatpush1.msra.mxu0 %v320
        %400 = vmatprep.subr.mxu0 %v319
        %401 = vmatpush1.msra.mxu0 %v318
        %402 = vmatprep.subr.mxu0 %v317
        %403 = vmatpush1.msra.mxu0 %v316
        %404 = vmatprep.subr.mxu0 %v315
        %405 = vmatpush1.msra.mxu0 %v314
        %406 = vmatprep.subr.mxu0 %v313
        %407 = vmatpush1.msra.mxu0 %v312
        %408 = vmatprep.subr.mxu0 0.0
        %409 = vmatpush2.msra.mxu0 0.0
        %410 = vmatprep.subr.mxu0 0.0
        %411 = vmatpush2.msra.mxu0 0.0
        %412 = vmatprep.subr.mxu0 0.0
        %413 = vmatpush2.msra.mxu0 0.0
        %414 = vmatprep.subr.mxu0 0.0
        %415 = vmatpush2.msra.mxu0 0.0
        %416 = vmatprep.subr.mxu0 0.0
        %417 = vmatpush2.msra.mxu0 0.0
        %418 = vmatprep.subr.mxu0 0.0
        %419 = vmatpush2.msra.mxu0 0.0
        %420 = vmatprep.subr.mxu0 0.0
        %421 = vmatpush2.msra.mxu0 0.0
        %422 = vmatprep.subr.mxu0 0.0
        %423 = vmatpush2.msra.mxu0 0.0
        %424 = vmatprep.subr.mxu0 0.0
        %425 = vmatpush2.msra.mxu0 0.0
        %426 = vmatprep.subr.mxu0 0.0
        %427 = vmatpush2.msra.mxu0 0.0
        %428 = vmatprep.subr.mxu0 0.0
        %429 = vmatpush2.msra.mxu0 0.0
        %430 = vmatprep.subr.mxu0 0.0
        %431 = vmatpush2.msra.mxu0 0.0
        %432 = vmatprep.subr.mxu0 0.0
        %433 = vmatpush2.msra.mxu0 0.0
        %434 = vmatprep.subr.mxu0 0.0
        %435 = vmatpush2.msra.mxu0 0.0
        %436 = vmatprep.subr.mxu0 0.0
        %437 = vmatpush2.msra.mxu0 0.0
        %438 = vmatprep.subr.mxu0 0.0
        %439 = vmatpush2.msra.mxu0 0.0
        %440 = vmatprep.mubr.f32.mxu0 0.0
        %441 = vmatmul.mubr.f32.gmra.mxu0 %v296
        %v442 = vpop.f32.mrf.mxu0
        %v443 = vadd.f32 %v344, %v442
        %v444 = vpop.f32.mrf.mxu0
        %v445 = vadd.f32 %v345, %v444
        %446 = vmatprep.mubr.f32.mxu0 0.0
        %447 = vmatmul.mubr.f32.gmra.mxu0 %v297
        %v448 = vpop.f32.mrf.mxu0
        %v449 = vadd.f32 %v346, %v448
        %v450 = vpop.f32.mrf.mxu0
        %v451 = vadd.f32 %v347, %v450
        %452 = vmatprep.mubr.f32.mxu0 0.0
        %453 = vmatmul.mubr.f32.gmra.mxu0 %v298
        %v454 = vpop.f32.mrf.mxu0
        %v455 = vadd.f32 %v348, %v454
        %v456 = vpop.f32.mrf.mxu0
        %v457 = vadd.f32 %v349, %v456
        %458 = vmatprep.mubr.f32.mxu0 0.0
        %459 = vmatmul.mubr.f32.gmra.mxu0 %v299
        %v460 = vpop.f32.mrf.mxu0
        %v461 = vadd.f32 %v350, %v460
        %v462 = vpop.f32.mrf.mxu0
        %v463 = vadd.f32 %v351, %v462
        %464 = vmatprep.mubr.f32.mxu0 0.0
        %465 = vmatmul.mubr.f32.gmra.mxu0 %v300
        %v466 = vpop.f32.mrf.mxu0
        %v467 = vadd.f32 %v352, %v466
        %v468 = vpop.f32.mrf.mxu0
        %v469 = vadd.f32 %v353, %v468
        %470 = vmatprep.mubr.f32.mxu0 0.0
        %471 = vmatmul.mubr.f32.gmra.mxu0 %v301
        %v472 = vpop.f32.mrf.mxu0
        %v473 = vadd.f32 %v354, %v472
        %v474 = vpop.f32.mrf.mxu0
        %v475 = vadd.f32 %v355, %v474
        %476 = vmatprep.mubr.f32.mxu0 0.0
        %477 = vmatmul.mubr.f32.gmra.mxu0 %v302
        %v478 = vpop.f32.mrf.mxu0
        %v479 = vadd.f32 %v356, %v478
        %v480 = vpop.f32.mrf.mxu0
        %v481 = vadd.f32 %v357, %v480
        %482 = vmatprep.mubr.f32.mxu0 0.0
        %483 = vmatmul.mubr.f32.gmra.mxu0 %v303
        %v484 = vpop.f32.mrf.mxu0
        %v485 = vadd.f32 %v358, %v484
        %v486 = vpop.f32.mrf.mxu0
        %v487 = vadd.f32 %v359, %v486
        %488 = vmatprep.mubr.f32.mxu0 0.0
        %489 = vmatmul.mubr.f32.gmra.mxu0 %v304
        %v490 = vpop.f32.mrf.mxu0
        %v491 = vadd.f32 %v360, %v490
        %v492 = vpop.f32.mrf.mxu0
        %v493 = vadd.f32 %v361, %v492
        %494 = vmatprep.mubr.f32.mxu0 0.0
        %495 = vmatmul.mubr.f32.gmra.mxu0 %v305
        %v496 = vpop.f32.mrf.mxu0
        %v497 = vadd.f32 %v362, %v496
        %v498 = vpop.f32.mrf.mxu0
        %v499 = vadd.f32 %v363, %v498
        %500 = vmatprep.mubr.f32.mxu0 0.0
        %501 = vmatmul.mubr.f32.gmra.mxu0 %v306
        %v502 = vpop.f32.mrf.mxu0
        %v503 = vadd.f32 %v364, %v502
        %v504 = vpop.f32.mrf.mxu0
        %v505 = vadd.f32 %v365, %v504
        %506 = vmatprep.mubr.f32.mxu0 0.0
        %507 = vmatmul.mubr.f32.gmra.mxu0 %v307
        %v508 = vpop.f32.mrf.mxu0
        %v509 = vadd.f32 %v366, %v508
        %v510 = vpop.f32.mrf.mxu0
        %v511 = vadd.f32 %v367, %v510
        %512 = vmatprep.mubr.f32.mxu0 0.0
        %513 = vmatmul.mubr.f32.gmra.mxu0 %v308
        %v514 = vpop.f32.mrf.mxu0
        %v515 = vadd.f32 %v368, %v514
        %v516 = vpop.f32.mrf.mxu0
        %v517 = vadd.f32 %v369, %v516
        %518 = vmatprep.mubr.f32.mxu0 0.0
        %519 = vmatmul.mubr.f32.gmra.mxu0 %v309
        %v520 = vpop.f32.mrf.mxu0
        %v521 = vadd.f32 %v370, %v520
        %v522 = vpop.f32.mrf.mxu0
        %v523 = vadd.f32 %v371, %v522
        %524 = vmatprep.mubr.f32.mxu0 0.0
        %525 = vmatmul.mubr.f32.gmra.mxu0 %v310
        %v526 = vpop.f32.mrf.mxu0
        %v527 = vadd.f32 %v372, %v526
        %v528 = vpop.f32.mrf.mxu0
        %v529 = vadd.f32 %v373, %v528
        %530 = vmatprep.mubr.f32.mxu0 0.0
        %531 = vmatmul.mubr.f32.gmra.mxu0 %v311
        %v532 = vpop.f32.mrf.mxu0
        %v533 = vadd.f32 %v374, %v532
        %v534 = vpop.f32.mrf.mxu0
        %v535 = vadd.f32 %v375, %v534
        %536 = vdwg.mxu0
        %537 = vxpose.xlu0.b32.start [1/16] %v443, 128
        %538 = vxpose.xlu0.b32.cont [2/16] %v449, 128
        %539 = vxpose.xlu0.b32.cont [3/16] %v455, 128
        %540 = vxpose.xlu0.b32.cont [4/16] %v461, 128
        %541 = vxpose.xlu0.b32.cont [5/16] %v467, 128
        %542 = vxpose.xlu0.b32.cont [6/16] %v473, 128
        %543 = vxpose.xlu0.b32.cont [7/16] %v479, 128
        %544 = vxpose.xlu0.b32.cont [8/16] %v485, 128
        %545 = vxpose.xlu0.b32.cont [9/16] %v491, 128
        %546 = vxpose.xlu0.b32.cont [10/16] %v497, 128
        %547 = vxpose.xlu0.b32.cont [11/16] %v503, 128
        %548 = vxpose.xlu0.b32.cont [12/16] %v509, 128
        %549 = vxpose.xlu0.b32.cont [13/16] %v515, 128
        %550 = vxpose.xlu0.b32.cont [14/16] %v521, 128
        %551 = vxpose.xlu0.b32.cont [15/16] %v527, 128
        %552 = vxpose.xlu0.b32.end [16/16] %v533, 128
        %v553 = vpop.trf.xlu0
        %v554 = vpop.trf.xlu0
        %v555 = vpop.trf.xlu0
        %v556 = vpop.trf.xlu0
        %v557 = vpop.trf.xlu0
        %v558 = vpop.trf.xlu0
        %v559 = vpop.trf.xlu0
        %v560 = vpop.trf.xlu0
        %v561 = vpop.trf.xlu0
        %v562 = vpop.trf.xlu0
        %v563 = vpop.trf.xlu0
        %v564 = vpop.trf.xlu0
        %v565 = vpop.trf.xlu0
        %v566 = vpop.trf.xlu0
        %v567 = vpop.trf.xlu0
        %v568 = vpop.trf.xlu0
        %569 = vxpose.xlu0.b32.start [1/16] %v445, 128
        %570 = vxpose.xlu0.b32.cont [2/16] %v451, 128
        %571 = vxpose.xlu0.b32.cont [3/16] %v457, 128
        %572 = vxpose.xlu0.b32.cont [4/16] %v463, 128
        %573 = vxpose.xlu0.b32.cont [5/16] %v469, 128
        %574 = vxpose.xlu0.b32.cont [6/16] %v475, 128
        %575 = vxpose.xlu0.b32.cont [7/16] %v481, 128
        %576 = vxpose.xlu0.b32.cont [8/16] %v487, 128
        %577 = vxpose.xlu0.b32.cont [9/16] %v493, 128
        %578 = vxpose.xlu0.b32.cont [10/16] %v499, 128
        %579 = vxpose.xlu0.b32.cont [11/16] %v505, 128
        %580 = vxpose.xlu0.b32.cont [12/16] %v511, 128
        %581 = vxpose.xlu0.b32.cont [13/16] %v517, 128
        %582 = vxpose.xlu0.b32.cont [14/16] %v523, 128
        %583 = vxpose.xlu0.b32.cont [15/16] %v529, 128
        %584 = vxpose.xlu0.b32.end [16/16] %v535, 128
        %v585 = vpop.trf.xlu0
        %v586 = vpop.trf.xlu0
        %v587 = vpop.trf.xlu0
        %v588 = vpop.trf.xlu0
        %v589 = vpop.trf.xlu0
        %v590 = vpop.trf.xlu0
        %v591 = vpop.trf.xlu0
        %v592 = vpop.trf.xlu0
        %v593 = vpop.trf.xlu0
        %v594 = vpop.trf.xlu0
        %v595 = vpop.trf.xlu0
        %v596 = vpop.trf.xlu0
        %v597 = vpop.trf.xlu0
        %v598 = vpop.trf.xlu0
        %v599 = vpop.trf.xlu0
        %v600 = vpop.trf.xlu0
        %v601 = vlaneseq
        %v602 = vshrl.u32 %v601, 7
        %v603 = vsub.s32 0, %v602
        %v604 = vrot.slane %v295, %v603
        %v605 = vadd.f32 %v553, %v604
        %v606 = vadd.f32 %v554, %v604
        %v607 = vadd.f32 %v555, %v604
        %v608 = vadd.f32 %v556, %v604
        %v609 = vadd.f32 %v557, %v604
        %v610 = vadd.f32 %v558, %v604
        %v611 = vadd.f32 %v559, %v604
        %v612 = vadd.f32 %v560, %v604
        %v613 = vadd.f32 %v561, %v604
        %v614 = vadd.f32 %v562, %v604
        %v615 = vadd.f32 %v563, %v604
        %v616 = vadd.f32 %v564, %v604
        %v617 = vadd.f32 %v565, %v604
        %v618 = vadd.f32 %v566, %v604
        %v619 = vadd.f32 %v567, %v604
        %v620 = vadd.f32 %v568, %v604
        %v621 = vadd.f32 %v585, %v604
        %v622 = vadd.f32 %v586, %v604
        %v623 = vadd.f32 %v587, %v604
        %v624 = vadd.f32 %v588, %v604
        %v625 = vadd.f32 %v589, %v604
        %v626 = vadd.f32 %v590, %v604
        %v627 = vadd.f32 %v591, %v604
        %v628 = vadd.f32 %v592, %v604
        %v629 = vadd.f32 %v593, %v604
        %v630 = vadd.f32 %v594, %v604
        %v631 = vadd.f32 %v595, %v604
        %v632 = vadd.f32 %v596, %v604
        %v633 = vadd.f32 %v597, %v604
        %v634 = vadd.f32 %v598, %v604
        %v635 = vadd.f32 %v599, %v604
        %v636 = vadd.f32 %v600, %v604
        %637 = vadd.xlane.f32.xlu0 %v605
        %v638 = vpop.xlane.xlu0 %637
        %639 = vadd.xlane.f32.xlu0 %v606
        %v640 = vpop.xlane.xlu0 %639
        %641 = vadd.xlane.f32.xlu0 %v607
        %v642 = vpop.xlane.xlu0 %641
        %643 = vadd.xlane.f32.xlu0 %v608
        %v644 = vpop.xlane.xlu0 %643
        %645 = vadd.xlane.f32.xlu0 %v609
        %v646 = vpop.xlane.xlu0 %645
        %647 = vadd.xlane.f32.xlu0 %v610
        %v648 = vpop.xlane.xlu0 %647
        %649 = vadd.xlane.f32.xlu0 %v611
        %v650 = vpop.xlane.xlu0 %649
        %651 = vadd.xlane.f32.xlu0 %v612
        %v652 = vpop.xlane.xlu0 %651
        %653 = vadd.xlane.f32.xlu0 %v613
        %v654 = vpop.xlane.xlu0 %653
        %655 = vadd.xlane.f32.xlu0 %v614
        %v656 = vpop.xlane.xlu0 %655
        %657 = vadd.xlane.f32.xlu0 %v615
        %v658 = vpop.xlane.xlu0 %657
        %659 = vadd.xlane.f32.xlu0 %v616
        %v660 = vpop.xlane.xlu0 %659
        %661 = vadd.xlane.f32.xlu0 %v617
        %v662 = vpop.xlane.xlu0 %661
        %663 = vadd.xlane.f32.xlu0 %v618
        %v664 = vpop.xlane.xlu0 %663
        %665 = vadd.xlane.f32.xlu0 %v619
        %v666 = vpop.xlane.xlu0 %665
        %667 = vadd.xlane.f32.xlu0 %v620
        %v668 = vpop.xlane.xlu0 %667
        %669 = vadd.xlane.f32.xlu0 %v621
        %v670 = vpop.xlane.xlu0 %669
        %671 = vadd.xlane.f32.xlu0 %v622
        %v672 = vpop.xlane.xlu0 %671
        %673 = vadd.xlane.f32.xlu0 %v623
        %v674 = vpop.xlane.xlu0 %673
        %675 = vadd.xlane.f32.xlu0 %v624
        %v676 = vpop.xlane.xlu0 %675
        %677 = vadd.xlane.f32.xlu0 %v625
        %v678 = vpop.xlane.xlu0 %677
        %679 = vadd.xlane.f32.xlu0 %v626
        %v680 = vpop.xlane.xlu0 %679
        %681 = vadd.xlane.f32.xlu0 %v627
        %v682 = vpop.xlane.xlu0 %681
        %683 = vadd.xlane.f32.xlu0 %v628
        %v684 = vpop.xlane.xlu0 %683
        %685 = vadd.xlane.f32.xlu0 %v629
        %v686 = vpop.xlane.xlu0 %685
        %687 = vadd.xlane.f32.xlu0 %v630
        %v688 = vpop.xlane.xlu0 %687
        %689 = vadd.xlane.f32.xlu0 %v631
        %v690 = vpop.xlane.xlu0 %689
        %691 = vadd.xlane.f32.xlu0 %v632
        %v692 = vpop.xlane.xlu0 %691
        %693 = vadd.xlane.f32.xlu0 %v633
        %v694 = vpop.xlane.xlu0 %693
        %695 = vadd.xlane.f32.xlu0 %v634
        %v696 = vpop.xlane.xlu0 %695
        %697 = vadd.xlane.f32.xlu0 %v635
        %v698 = vpop.xlane.xlu0 %697
        %699 = vadd.xlane.f32.xlu0 %v636
        %v700 = vpop.xlane.xlu0 %699
        %v701 = vrcp.pop 128.0
        %v702 = vmul.f32 %v638, %v701
        %v703 = vmul.f32 %v640, %v701
        %v704 = vmul.f32 %v642, %v701
        %v705 = vmul.f32 %v644, %v701
        %v706 = vmul.f32 %v646, %v701
        %v707 = vmul.f32 %v648, %v701
        %v708 = vmul.f32 %v650, %v701
        %v709 = vmul.f32 %v652, %v701
        %v710 = vmul.f32 %v654, %v701
        %v711 = vmul.f32 %v656, %v701
        %v712 = vmul.f32 %v658, %v701
        %v713 = vmul.f32 %v660, %v701
        %v714 = vmul.f32 %v662, %v701
        %v715 = vmul.f32 %v664, %v701
        %v716 = vmul.f32 %v666, %v701
        %v717 = vmul.f32 %v668, %v701
        %v718 = vmul.f32 %v670, %v701
        %v719 = vmul.f32 %v672, %v701
        %v720 = vmul.f32 %v674, %v701
        %v721 = vmul.f32 %v676, %v701
        %v722 = vmul.f32 %v678, %v701
        %v723 = vmul.f32 %v680, %v701
        %v724 = vmul.f32 %v682, %v701
        %v725 = vmul.f32 %v684, %v701
        %v726 = vmul.f32 %v686, %v701
        %v727 = vmul.f32 %v688, %v701
        %v728 = vmul.f32 %v690, %v701
        %v729 = vmul.f32 %v692, %v701
        %v730 = vmul.f32 %v694, %v701
        %v731 = vmul.f32 %v696, %v701
        %v732 = vmul.f32 %v698, %v701
        %v733 = vmul.f32 %v700, %v701
        %v734 = vsub.f32 %v605, %v702
        %v735 = vsub.f32 %v606, %v703
        %v736 = vsub.f32 %v607, %v704
        %v737 = vsub.f32 %v608, %v705
        %v738 = vsub.f32 %v609, %v706
        %v739 = vsub.f32 %v610, %v707
        %v740 = vsub.f32 %v611, %v708
        %v741 = vsub.f32 %v612, %v709
        %v742 = vsub.f32 %v613, %v710
        %v743 = vsub.f32 %v614, %v711
        %v744 = vsub.f32 %v615, %v712
        %v745 = vsub.f32 %v616, %v713
        %v746 = vsub.f32 %v617, %v714
        %v747 = vsub.f32 %v618, %v715
        %v748 = vsub.f32 %v619, %v716
        %v749 = vsub.f32 %v620, %v717
        %v750 = vsub.f32 %v621, %v718
        %v751 = vsub.f32 %v622, %v719
        %v752 = vsub.f32 %v623, %v720
        %v753 = vsub.f32 %v624, %v721
        %v754 = vsub.f32 %v625, %v722
        %v755 = vsub.f32 %v626, %v723
        %v756 = vsub.f32 %v627, %v724
        %v757 = vsub.f32 %v628, %v725
        %v758 = vsub.f32 %v629, %v726
        %v759 = vsub.f32 %v630, %v727
        %v760 = vsub.f32 %v631, %v728
        %v761 = vsub.f32 %v632, %v729
        %v762 = vsub.f32 %v633, %v730
        %v763 = vsub.f32 %v634, %v731
        %v764 = vsub.f32 %v635, %v732
        %v765 = vsub.f32 %v636, %v733
        %v766 = vmul.f32 %v734, %v734
        %v767 = vmul.f32 %v735, %v735
        %v768 = vmul.f32 %v736, %v736
        %v769 = vmul.f32 %v737, %v737
        %v770 = vmul.f32 %v738, %v738
        %v771 = vmul.f32 %v739, %v739
        %v772 = vmul.f32 %v740, %v740
        %v773 = vmul.f32 %v741, %v741
        %v774 = vmul.f32 %v742, %v742
        %v775 = vmul.f32 %v743, %v743
        %v776 = vmul.f32 %v744, %v744
        %v777 = vmul.f32 %v745, %v745
        %v778 = vmul.f32 %v746, %v746
        %v779 = vmul.f32 %v747, %v747
        %v780 = vmul.f32 %v748, %v748
        %v781 = vmul.f32 %v749, %v749
        %v782 = vmul.f32 %v750, %v750
        %v783 = vmul.f32 %v751, %v751
        %v784 = vmul.f32 %v752, %v752
        %v785 = vmul.f32 %v753, %v753
        %v786 = vmul.f32 %v754, %v754
        %v787 = vmul.f32 %v755, %v755
        %v788 = vmul.f32 %v756, %v756
        %v789 = vmul.f32 %v757, %v757
        %v790 = vmul.f32 %v758, %v758
        %v791 = vmul.f32 %v759, %v759
        %v792 = vmul.f32 %v760, %v760
        %v793 = vmul.f32 %v761, %v761
        %v794 = vmul.f32 %v762, %v762
        %v795 = vmul.f32 %v763, %v763
        %v796 = vmul.f32 %v764, %v764
        %v797 = vmul.f32 %v765, %v765
        %798 = vadd.xlane.f32.xlu0 %v766
        %v799 = vpop.xlane.xlu0 %798
        %800 = vadd.xlane.f32.xlu0 %v767
        %v801 = vpop.xlane.xlu0 %800
        %802 = vadd.xlane.f32.xlu0 %v768
        %v803 = vpop.xlane.xlu0 %802
        %804 = vadd.xlane.f32.xlu0 %v769
        %v805 = vpop.xlane.xlu0 %804
        %806 = vadd.xlane.f32.xlu0 %v770
        %v807 = vpop.xlane.xlu0 %806
        %808 = vadd.xlane.f32.xlu0 %v771
        %v809 = vpop.xlane.xlu0 %808
        %810 = vadd.xlane.f32.xlu0 %v772
        %v811 = vpop.xlane.xlu0 %810
        %812 = vadd.xlane.f32.xlu0 %v773
        %v813 = vpop.xlane.xlu0 %812
        %814 = vadd.xlane.f32.xlu0 %v774
        %v815 = vpop.xlane.xlu0 %814
        %816 = vadd.xlane.f32.xlu0 %v775
        %v817 = vpop.xlane.xlu0 %816
        %818 = vadd.xlane.f32.xlu0 %v776
        %v819 = vpop.xlane.xlu0 %818
        %820 = vadd.xlane.f32.xlu0 %v777
        %v821 = vpop.xlane.xlu0 %820
        %822 = vadd.xlane.f32.xlu0 %v778
        %v823 = vpop.xlane.xlu0 %822
        %824 = vadd.xlane.f32.xlu0 %v779
        %v825 = vpop.xlane.xlu0 %824
        %826 = vadd.xlane.f32.xlu0 %v780
        %v827 = vpop.xlane.xlu0 %826
        %828 = vadd.xlane.f32.xlu0 %v781
        %v829 = vpop.xlane.xlu0 %828
        %830 = vadd.xlane.f32.xlu0 %v782
        %v831 = vpop.xlane.xlu0 %830
        %832 = vadd.xlane.f32.xlu0 %v783
        %v833 = vpop.xlane.xlu0 %832
        %834 = vadd.xlane.f32.xlu0 %v784
        %v835 = vpop.xlane.xlu0 %834
        %836 = vadd.xlane.f32.xlu0 %v785
        %v837 = vpop.xlane.xlu0 %836
        %838 = vadd.xlane.f32.xlu0 %v786
        %v839 = vpop.xlane.xlu0 %838
        %840 = vadd.xlane.f32.xlu0 %v787
        %v841 = vpop.xlane.xlu0 %840
        %842 = vadd.xlane.f32.xlu0 %v788
        %v843 = vpop.xlane.xlu0 %842
        %844 = vadd.xlane.f32.xlu0 %v789
        %v845 = vpop.xlane.xlu0 %844
        %846 = vadd.xlane.f32.xlu0 %v790
        %v847 = vpop.xlane.xlu0 %846
        %848 = vadd.xlane.f32.xlu0 %v791
        %v849 = vpop.xlane.xlu0 %848
        %850 = vadd.xlane.f32.xlu0 %v792
        %v851 = vpop.xlane.xlu0 %850
        %852 = vadd.xlane.f32.xlu0 %v793
        %v853 = vpop.xlane.xlu0 %852
        %854 = vadd.xlane.f32.xlu0 %v794
        %v855 = vpop.xlane.xlu0 %854
        %856 = vadd.xlane.f32.xlu0 %v795
        %v857 = vpop.xlane.xlu0 %856
        %858 = vadd.xlane.f32.xlu0 %v796
        %v859 = vpop.xlane.xlu0 %858
        %860 = vadd.xlane.f32.xlu0 %v797
        %v861 = vpop.xlane.xlu0 %860
        %v862 = vmul.f32 %v799, %v701
        %v863 = vmul.f32 %v801, %v701
        %v864 = vmul.f32 %v803, %v701
        %v865 = vmul.f32 %v805, %v701
        %v866 = vmul.f32 %v807, %v701
        %v867 = vmul.f32 %v809, %v701
        %v868 = vmul.f32 %v811, %v701
        %v869 = vmul.f32 %v813, %v701
        %v870 = vmul.f32 %v815, %v701
        %v871 = vmul.f32 %v817, %v701
        %v872 = vmul.f32 %v819, %v701
        %v873 = vmul.f32 %v821, %v701
        %v874 = vmul.f32 %v823, %v701
        %v875 = vmul.f32 %v825, %v701
        %v876 = vmul.f32 %v827, %v701
        %v877 = vmul.f32 %v829, %v701
        %v878 = vmul.f32 %v831, %v701
        %v879 = vmul.f32 %v833, %v701
        %v880 = vmul.f32 %v835, %v701
        %v881 = vmul.f32 %v837, %v701
        %v882 = vmul.f32 %v839, %v701
        %v883 = vmul.f32 %v841, %v701
        %v884 = vmul.f32 %v843, %v701
        %v885 = vmul.f32 %v845, %v701
        %v886 = vmul.f32 %v847, %v701
        %v887 = vmul.f32 %v849, %v701
        %v888 = vmul.f32 %v851, %v701
        %v889 = vmul.f32 %v853, %v701
        %v890 = vmul.f32 %v855, %v701
        %v891 = vmul.f32 %v857, %v701
        %v892 = vmul.f32 %v859, %v701
        %v893 = vmul.f32 %v861, %v701
        %v894 = vadd.f32 %v862, 1e-12
        %v895 = vadd.f32 %v863, 1e-12
        %v896 = vadd.f32 %v864, 1e-12
        %v897 = vadd.f32 %v865, 1e-12
        %v898 = vadd.f32 %v866, 1e-12
        %v899 = vadd.f32 %v867, 1e-12
        %v900 = vadd.f32 %v868, 1e-12
        %v901 = vadd.f32 %v869, 1e-12
        %v902 = vadd.f32 %v870, 1e-12
        %v903 = vadd.f32 %v871, 1e-12
        %v904 = vadd.f32 %v872, 1e-12
        %v905 = vadd.f32 %v873, 1e-12
        %v906 = vadd.f32 %v874, 1e-12
        %v907 = vadd.f32 %v875, 1e-12
        %v908 = vadd.f32 %v876, 1e-12
        %v909 = vadd.f32 %v877, 1e-12
        %v910 = vadd.f32 %v878, 1e-12
        %v911 = vadd.f32 %v879, 1e-12
        %v912 = vadd.f32 %v880, 1e-12
        %v913 = vadd.f32 %v881, 1e-12
        %v914 = vadd.f32 %v882, 1e-12
        %v915 = vadd.f32 %v883, 1e-12
        %v916 = vadd.f32 %v884, 1e-12
        %v917 = vadd.f32 %v885, 1e-12
        %v918 = vadd.f32 %v886, 1e-12
        %v919 = vadd.f32 %v887, 1e-12
        %v920 = vadd.f32 %v888, 1e-12
        %v921 = vadd.f32 %v889, 1e-12
        %v922 = vadd.f32 %v890, 1e-12
        %v923 = vadd.f32 %v891, 1e-12
        %v924 = vadd.f32 %v892, 1e-12
        %v925 = vadd.f32 %v893, 1e-12
        %v926 = vrsqrt.pop %v894
        %v927 = vrsqrt.pop %v895
        %v928 = vrsqrt.pop %v896
        %v929 = vrsqrt.pop %v897
        %v930 = vrsqrt.pop %v898
        %v931 = vrsqrt.pop %v899
        %v932 = vrsqrt.pop %v900
        %v933 = vrsqrt.pop %v901
        %v934 = vrsqrt.pop %v902
        %v935 = vrsqrt.pop %v903
        %v936 = vrsqrt.pop %v904
        %v937 = vrsqrt.pop %v905
        %v938 = vrsqrt.pop %v906
        %v939 = vrsqrt.pop %v907
        %v940 = vrsqrt.pop %v908
        %v941 = vrsqrt.pop %v909
        %v942 = vrsqrt.pop %v910
        %v943 = vrsqrt.pop %v911
        %v944 = vrsqrt.pop %v912
        %v945 = vrsqrt.pop %v913
        %v946 = vrsqrt.pop %v914
        %v947 = vrsqrt.pop %v915
        %v948 = vrsqrt.pop %v916
        %v949 = vrsqrt.pop %v917
        %v950 = vrsqrt.pop %v918
        %v951 = vrsqrt.pop %v919
        %v952 = vrsqrt.pop %v920
        %v953 = vrsqrt.pop %v921
        %v954 = vrsqrt.pop %v922
        %v955 = vrsqrt.pop %v923
        %v956 = vrsqrt.pop %v924
        %v957 = vrsqrt.pop %v925
        %v958 = vmul.f32 %v734, %v926
        %v959 = vmul.f32 %v735, %v927
        %v960 = vmul.f32 %v736, %v928
        %v961 = vmul.f32 %v737, %v929
        %v962 = vmul.f32 %v738, %v930
        %v963 = vmul.f32 %v739, %v931
        %v964 = vmul.f32 %v740, %v932
        %v965 = vmul.f32 %v741, %v933
        %v966 = vmul.f32 %v742, %v934
        %v967 = vmul.f32 %v743, %v935
        %v968 = vmul.f32 %v744, %v936
        %v969 = vmul.f32 %v745, %v937
        %v970 = vmul.f32 %v746, %v938
        %v971 = vmul.f32 %v747, %v939
        %v972 = vmul.f32 %v748, %v940
        %v973 = vmul.f32 %v749, %v941
        %v974 = vmul.f32 %v750, %v942
        %v975 = vmul.f32 %v751, %v943
        %v976 = vmul.f32 %v752, %v944
        %v977 = vmul.f32 %v753, %v945
        %v978 = vmul.f32 %v754, %v946
        %v979 = vmul.f32 %v755, %v947
        %v980 = vmul.f32 %v756, %v948
        %v981 = vmul.f32 %v757, %v949
        %v982 = vmul.f32 %v758, %v950
        %v983 = vmul.f32 %v759, %v951
        %v984 = vmul.f32 %v760, %v952
        %v985 = vmul.f32 %v761, %v953
        %v986 = vmul.f32 %v762, %v954
        %v987 = vmul.f32 %v763, %v955
        %v988 = vmul.f32 %v764, %v956
        %v989 = vmul.f32 %v765, %v957
        %v990 = vlaneseq
        %v991 = vshrl.u32 %v990, 7
        %v992 = vsub.s32 1, %v991
        %v993 = vrot.slane %v295, %v992
        %v994 = vmul.f32 %v958, %v993
        %v995 = vmul.f32 %v959, %v993
        %v996 = vmul.f32 %v960, %v993
        %v997 = vmul.f32 %v961, %v993
        %v998 = vmul.f32 %v962, %v993
        %v999 = vmul.f32 %v963, %v993
        %v1000 = vmul.f32 %v964, %v993
        %v1001 = vmul.f32 %v965, %v993
        %v1002 = vmul.f32 %v966, %v993
        %v1003 = vmul.f32 %v967, %v993
        %v1004 = vmul.f32 %v968, %v993
        %v1005 = vmul.f32 %v969, %v993
        %v1006 = vmul.f32 %v970, %v993
        %v1007 = vmul.f32 %v971, %v993
        %v1008 = vmul.f32 %v972, %v993
        %v1009 = vmul.f32 %v973, %v993
        %v1010 = vmul.f32 %v974, %v993
        %v1011 = vmul.f32 %v975, %v993
        %v1012 = vmul.f32 %v976, %v993
        %v1013 = vmul.f32 %v977, %v993
        %v1014 = vmul.f32 %v978, %v993
        %v1015 = vmul.f32 %v979, %v993
        %v1016 = vmul.f32 %v980, %v993
        %v1017 = vmul.f32 %v981, %v993
        %v1018 = vmul.f32 %v982, %v993
        %v1019 = vmul.f32 %v983, %v993
        %v1020 = vmul.f32 %v984, %v993
        %v1021 = vmul.f32 %v985, %v993
        %v1022 = vmul.f32 %v986, %v993
        %v1023 = vmul.f32 %v987, %v993
        %v1024 = vmul.f32 %v988, %v993
        %v1025 = vmul.f32 %v989, %v993
        %v1026 = vlaneseq
        %v1027 = vshrl.u32 %v1026, 7
        %v1028 = vsub.s32 2, %v1027
        %v1029 = vrot.slane %v295, %v1028
        %v1030 = vadd.f32 %v994, %v1029
        %v1031 = vadd.f32 %v995, %v1029
        %v1032 = vadd.f32 %v996, %v1029
        %v1033 = vadd.f32 %v997, %v1029
        %v1034 = vadd.f32 %v998, %v1029
        %v1035 = vadd.f32 %v999, %v1029
        %v1036 = vadd.f32 %v1000, %v1029
        %v1037 = vadd.f32 %v1001, %v1029
        %v1038 = vadd.f32 %v1002, %v1029
        %v1039 = vadd.f32 %v1003, %v1029
        %v1040 = vadd.f32 %v1004, %v1029
        %v1041 = vadd.f32 %v1005, %v1029
        %v1042 = vadd.f32 %v1006, %v1029
        %v1043 = vadd.f32 %v1007, %v1029
        %v1044 = vadd.f32 %v1008, %v1029
        %v1045 = vadd.f32 %v1009, %v1029
        %v1046 = vadd.f32 %v1010, %v1029
        %v1047 = vadd.f32 %v1011, %v1029
        %v1048 = vadd.f32 %v1012, %v1029
        %v1049 = vadd.f32 %v1013, %v1029
        %v1050 = vadd.f32 %v1014, %v1029
        %v1051 = vadd.f32 %v1015, %v1029
        %v1052 = vadd.f32 %v1016, %v1029
        %v1053 = vadd.f32 %v1017, %v1029
        %v1054 = vadd.f32 %v1018, %v1029
        %v1055 = vadd.f32 %v1019, %v1029
        %v1056 = vadd.f32 %v1020, %v1029
        %v1057 = vadd.f32 %v1021, %v1029
        %v1058 = vadd.f32 %v1022, %v1029
        %v1059 = vadd.f32 %v1023, %v1029
        %v1060 = vadd.f32 %v1024, %v1029
        %v1061 = vadd.f32 %v1025, %v1029
        %1062 = vst [vmem:[%s291] sm:$0xff] %v1030
        %1063 = vst [vmem:[%s291 + $0x8] sm:$0xff] %v1031
        %1064 = vst [vmem:[%s291 + $0x10] sm:$0xff] %v1032
        %1065 = vst [vmem:[%s291 + $0x18] sm:$0xff] %v1033
        %1066 = vst [vmem:[%s291 + $0x20] sm:$0xff] %v1034
        %1067 = vst [vmem:[%s291 + $0x28] sm:$0xff] %v1035
        %1068 = vst [vmem:[%s291 + $0x30] sm:$0xff] %v1036
        %1069 = vst [vmem:[%s291 + $0x38] sm:$0xff] %v1037
        %1070 = vst [vmem:[%s291 + $0x40] sm:$0xff] %v1038
        %1071 = vst [vmem:[%s291 + $0x48] sm:$0xff] %v1039
        %1072 = vst [vmem:[%s291 + $0x50] sm:$0xff] %v1040
        %1073 = vst [vmem:[%s291 + $0x58] sm:$0xff] %v1041
        %1074 = vst [vmem:[%s291 + $0x60] sm:$0xff] %v1042
        %1075 = vst [vmem:[%s291 + $0x68] sm:$0xff] %v1043
        %1076 = vst [vmem:[%s291 + $0x70] sm:$0xff] %v1044
        %1077 = vst [vmem:[%s291 + $0x78] sm:$0xff] %v1045
        %1078 = vst [vmem:[%s291 + $0x80] sm:$0xff] %v1046
        %1079 = vst [vmem:[%s291 + $0x88] sm:$0xff] %v1047
        %1080 = vst [vmem:[%s291 + $0x90] sm:$0xff] %v1048
        %1081 = vst [vmem:[%s291 + $0x98] sm:$0xff] %v1049
        %1082 = vst [vmem:[%s291 + $0xa0] sm:$0xff] %v1050
        %1083 = vst [vmem:[%s291 + $0xa8] sm:$0xff] %v1051
        %1084 = vst [vmem:[%s291 + $0xb0] sm:$0xff] %v1052
        %1085 = vst [vmem:[%s291 + $0xb8] sm:$0xff] %v1053
        %1086 = vst [vmem:[%s291 + $0xc0] sm:$0xff] %v1054
        %1087 = vst [vmem:[%s291 + $0xc8] sm:$0xff] %v1055
        %1088 = vst [vmem:[%s291 + $0xd0] sm:$0xff] %v1056
        %1089 = vst [vmem:[%s291 + $0xd8] sm:$0xff] %v1057
        %1090 = vst [vmem:[%s291 + $0xe0] sm:$0xff] %v1058
        %1091 = vst [vmem:[%s291 + $0xe8] sm:$0xff] %v1059
        %1092 = vst [vmem:[%s291 + $0xf0] sm:$0xff] %v1060
        %1093 = vst [vmem:[%s291 + $0xf8] sm:$0xff] %v1061
        %s1094 = sand.u32 %s144, 1
        %s1095 = scalar_lea.sflag [#allocation4], %s1094
        %s1096 = sand.u32 %s144, 1
        %s1097 = smul.addr %s1096, 256
        %s1098 = scalar_lea.vmem [#allocation8], %s1097
        // Predicated region
        $region49: #{tpu_custom_call.1} parent=35 // pred_check
          %p1099 = pneg %p154
        $region50: #{tpu_custom_call.1} parent=35 // pred_check_branch
          %1101 = sbr.rel (%p1099) target = $region52
        $region51: #{tpu_custom_call.1} parent=35 // pred_region
          %s1102 = smul.u32 32, %s29
          %s1104 = ssub.s32 4096, 4096
          %1105 = vsyncadd %s1095, %s1104
          %s1106 = smul.addr %s28, 32
          %s1107 = sadd.s32 %s1102, %s1106
          %s1108 = smul.addr %s1107, 128
          %s1109 = scalar_lea.hbm %s4, %s1108
          %s1110 = sshll.u32 %s1098, 4
          %s1111 = int_to_ptr.vmem [resolvable:$true] %s1110
          %1116 = dma.vmem_to_hbm [thread:$0]  %s1111, 4096, %s1109, %s1095, 128, 128, 8
        $region52: #{tpu_custom_call.1} parent=35 // pred_fallthru
          _
      $region36: #{tpu_custom_call.1} parent=5 // pred_fallthru
        _
      %p1117 = scmp.le.s32.totalorder 2, %s19
      // Predicated region
      $region53: #{tpu_custom_call.1} parent=5 // pred_check
        %p1118 = pneg %p1117
      $region54: #{tpu_custom_call.1} parent=5 // pred_check_branch
        %1120 = sbr.rel (%p1118) target = $region56
      $region55: #{tpu_custom_call.1} parent=5 // pred_region
        %s1121 = ssub.s32 %s19, 2
        // Predicated region
        $region57: #{tpu_custom_call.1} parent=55 // pred_check
          %p1122 = pneg %p160
        $region58: #{tpu_custom_call.1} parent=55 // pred_check_branch
          %1124 = sbr.rel (%p1122) target = $region60
        $region59: #{tpu_custom_call.1} parent=55 // pred_region
          %s1125 = sand.u32 %s145, 1
          %s1126 = scalar_lea.sflag [#allocation4], %s1125
          %s1127 = sand.u32 %s145, 1
          %s1128 = smul.addr %s1127, 256
          %s1129 = scalar_lea.vmem [#allocation8], %s1128
          %1130 = dma.done %s1126, 4096
        $region60: #{tpu_custom_call.1} parent=55 // pred_fallthru
          _
      $region56: #{tpu_custom_call.1} parent=5 // pred_fallthru
        _
    $region6: #{tpu_custom_call.1} parent=1 // loop_footer
      %s23 = sadd.s32 1, %s19
    $region7: #{tpu_custom_call.1} parent=1 // loop_footer_branch
      %18 = sbr.rel target = $region3
    $region8: #{tpu_custom_call.1} parent=1 // loop_exit
      _
    %1131 = vsyncpa [#allocation3], 1
    %s1132 = scalar_lea.sflag [#allocation3], 1
    %1133 = vsyncpa %s1132, 1
    %1134 = vsyncpa [#allocation6], 1
    %s1135 = scalar_lea.sflag [#allocation6], 1
    %1136 = vsyncpa %s1135, 1
    %1137 = vsyncpa [#allocation4], 1
    %s1138 = scalar_lea.sflag [#allocation4], 1
    %1139 = vsyncpa %s1138, 1

</llo_original>
